<compile_context>
chip_gen: v7x
topology: tpu7x:2x2x1
jax: 0.10.0
libtpu: 0.0.40
codegen_flags: <defaults>
</compile_context>

<pallas_src>
import functools

import jax
import jax.numpy as jnp
from jax.experimental import pallas as pl
from jax.experimental.pallas import tpu as pltpu

H1, H2 = 64, 32      # real hidden widths from the PyTorch module
LANE = 128           # TPU lane width; hidden dims are zero-padded to this


def _round_up(n, m):
    return (n + m - 1) // m * m


def _mlp_kernel(x_ref, p_ref, o_ref, *, dp, misc):
    """One (TB, dp) batch tile of relu(x@W1+b1) -> relu(.@W2+b2) -> .@W3+b3.

    p_ref is a single packed f32 slab of shape (dp + 128 + 8, 128):
      rows [0, dp)        : W1 zero-padded to (dp, 128)
      rows [dp, dp+128)   : W2 zero-padded to (128, 128)
      rows [misc, misc+8) : row 0 = b1, row 1 = b2, row 2 = W3^T row, row 3 = b3
    Padded columns/rows are zero, so the padded math is exact.
    """
    x = x_ref[...]                                   # (TB, dp)
    w1 = p_ref[0:dp, :]                              # (dp, 128)
    w2 = p_ref[dp:dp + LANE, :]                      # (128, 128)
    m = p_ref[misc:misc + 8, :]                      # sublane-aligned (8, 128)
    b1 = m[0:1, :]                                   # (1, 128), hoisted once
    b2 = m[1:2, :]                                   # (1, 128)
    w3 = m[2:3, :]                                   # (1, 128)  W3 as a row
    b3 = m[3:4, 0:1]                                 # (1, 1)

    h1 = jnp.maximum(
        jnp.dot(x, w1, preferred_element_type=jnp.float32) + b1, 0.0)
    h2 = jnp.maximum(
        jnp.dot(h1, w2, preferred_element_type=jnp.float32) + b2, 0.0)
    # Final N=1 layer on the VPU + lane reduce (MXU pass would be pure latency).
    y = jnp.sum(h2 * w3, axis=-1, keepdims=True) + b3   # (TB, 1)
    o_ref[...] = y.astype(o_ref.dtype)


def pack_params(params, input_size):
    """Pack (W1,b1,W2,b2,W3,b3) into one zero-padded (dp+128+8, 128) slab."""
    w1, b1, w2, b2, w3, b3 = params
    dp = _round_up(input_size, 8)
    misc = dp + LANE
    slab = jnp.zeros((misc + 8, LANE), jnp.float32)
    slab = slab.at[:input_size, :H1].set(w1.astype(jnp.float32))
    slab = slab.at[dp:dp + H1, :H2].set(w2.astype(jnp.float32))
    slab = slab.at[misc, :H1].set(b1.reshape(-1).astype(jnp.float32))
    slab = slab.at[misc + 1, :H2].set(b2.reshape(-1).astype(jnp.float32))
    slab = slab.at[misc + 2, :H2].set(w3.reshape(-1).astype(jnp.float32))
    slab = slab.at[misc + 3, 0].set(b3.reshape(-1)[0].astype(jnp.float32))
    return slab


@jax.jit
def vital_signs_forward(x, slab):
    """Runs the fused MLP; x is (B, input_size), slab from pack_params()."""
    B, D = x.shape
    dp = slab.shape[0] - LANE - 8
    misc = dp + LANE

    # Batch tile: full batch (rounded to a sublane multiple) when small,
    # 128-row tiles when large; grid axis is "parallel" (megacore/v7x).
    tb = LANE if B >= LANE else _round_up(B, 8)
    bp = _round_up(B, tb)
    xp = jnp.zeros((bp, dp), jnp.float32).at[:B, :D].set(x.astype(jnp.float32))

    kernel = functools.partial(_mlp_kernel, dp=dp, misc=misc)
    out = pl.pallas_call(
        kernel,
        out_shape=jax.ShapeDtypeStruct((bp, 1), jnp.float32),
        grid_spec=pltpu.PrefetchScalarGridSpec(
            num_scalar_prefetch=0,
            grid=(bp // tb,),
            in_specs=[
                pl.BlockSpec((tb, dp), lambda i: (i, 0)),        # x batch tile
                pl.BlockSpec(slab.shape, lambda i: (0, 0)),      # params resident
            ],
            out_specs=pl.BlockSpec((tb, 1), lambda i: (i, 0)),
        ),
        compiler_params=pltpu.CompilerParams(
            dimension_semantics=("parallel",)),
    )(xp, slab)
    return out[:B]


def init_params(input_size, key):
    """Deterministic PyTorch-style (uniform +/- 1/sqrt(fan_in)) init."""
    def linear(key, fan_in, fan_out):
        kw, kb = jax.random.split(key)
        bound = 1.0 / jnp.sqrt(float(fan_in))
        w = jax.random.uniform(kw, (fan_in, fan_out), jnp.float32, -bound, bound)
        b = jax.random.uniform(kb, (1, fan_out), jnp.float32, -bound, bound)
        return w, b

    k1, k2, k3 = jax.random.split(key, 3)
    w1, b1 = linear(k1, input_size, H1)
    w2, b2 = linear(k2, H1, H2)
    w3, b3 = linear(k3, H2, 1)
    return (w1, b1, w2, b2, w3, b3)


def reference_forward(x, params):
    w1, b1, w2, b2, w3, b3 = params
    h = jnp.maximum(x @ w1 + b1, 0.0)
    h = jnp.maximum(h @ w2 + b2, 0.0)
    return h @ w3 + b3


if __name__ == "__main__":
    key = jax.random.PRNGKey(0)
    k_x, k_p = jax.random.split(key)

    batch, input_size = 8, 16   # small shapes consistent with the module
    x = jax.random.normal(k_x, (batch, input_size), dtype=jnp.float32)
    params = init_params(input_size, k_p)
    slab = pack_params(params, input_size)

    out = vital_signs_forward(x, slab)
    out = jax.block_until_ready(out)

    ref = reference_forward(x, params)
    assert out.shape == (batch, 1)
    assert jnp.allclose(out, ref, atol=1e-5, rtol=1e-5)

    print("KERNEL_OK")
</pallas_src>

<mosaic_0001>
module attributes {stable_mosaic.version = 11 : i64} {
  func.func @_mlp_kernel(%arg0: i32, %arg1: memref<8x16xf32, #tpu.memory_space<vmem>>, %arg2: memref<152x128xf32, #tpu.memory_space<vmem>>, %arg3: memref<8x1xf32, #tpu.memory_space<vmem>>) attributes {dimension_semantics = [#tpu.dimension_semantics<parallel>], iteration_bounds = array<i64: 1>, scalar_prefetch = 0 : i64, scratch_operands = 0 : i64, tpu.core_type = #tpu.core_type<tc>, window_params = [{transform_indices = @transform_0, window_bounds = array<i64: 8, 16>}, {pipeline_mode = #tpu.pipeline_mode<synchronous>, transform_indices = @transform_1, window_bounds = array<i64: 152, 128>}, {transform_indices = @transform_2, window_bounds = array<i64: 8, 1>}]} {
    %c0 = arith.constant 0 : index
    %c0_0 = arith.constant 0 : index
    %0 = vector.load %arg1[%c0, %c0_0] : memref<8x16xf32, #tpu.memory_space<vmem>>, vector<8x16xf32>
    %c0_1 = arith.constant 0 : index
    %c0_2 = arith.constant 0 : index
    %1 = vector.load %arg2[%c0_1, %c0_2] : memref<152x128xf32, #tpu.memory_space<vmem>>, vector<16x128xf32>
    %c16 = arith.constant 16 : index
    %c0_3 = arith.constant 0 : index
    %2 = vector.load %arg2[%c16, %c0_3] : memref<152x128xf32, #tpu.memory_space<vmem>>, vector<128x128xf32>
    %c144 = arith.constant 144 : index
    %c0_4 = arith.constant 0 : index
    %3 = vector.load %arg2[%c144, %c0_4] : memref<152x128xf32, #tpu.memory_space<vmem>>, vector<8x128xf32>
    %4 = vector.extract_strided_slice %3 {offsets = [0, 0], sizes = [1, 128], strides = [1, 1]} : vector<8x128xf32> to vector<1x128xf32>
    %5 = vector.extract_strided_slice %3 {offsets = [1, 0], sizes = [1, 128], strides = [1, 1]} : vector<8x128xf32> to vector<1x128xf32>
    %6 = vector.extract_strided_slice %3 {offsets = [2, 0], sizes = [1, 128], strides = [1, 1]} : vector<8x128xf32> to vector<1x128xf32>
    %7 = vector.extract_strided_slice %3 {offsets = [3, 0], sizes = [1, 1], strides = [1, 1]} : vector<8x128xf32> to vector<1x1xf32>
    %cst = arith.constant dense<0.000000e+00> : vector<8x128xf32>
    %8 = tpu.matmul %0, %1, %cst {dimension_numbers = #tpu.dot_dimension_numbers<[1], [0], [0], [1], [0, 0, 1, 1], [], []>} : vector<8x16xf32>, vector<16x128xf32>, vector<8x128xf32> -> vector<8x128xf32>
    %9 = vector.broadcast %4 : vector<1x128xf32> to vector<8x128xf32>
    %10 = arith.addf %8, %9 : vector<8x128xf32>
    %cst_5 = arith.constant 0.000000e+00 : f32
    %11 = vector.broadcast %cst_5 : f32 to vector<8x128xf32>
    %12 = arith.maximumf %10, %11 : vector<8x128xf32>
    %cst_6 = arith.constant dense<0.000000e+00> : vector<8x128xf32>
    %13 = tpu.matmul %12, %2, %cst_6 {dimension_numbers = #tpu.dot_dimension_numbers<[1], [0], [0], [1], [0, 0, 1, 1], [], []>} : vector<8x128xf32>, vector<128x128xf32>, vector<8x128xf32> -> vector<8x128xf32>
    %14 = vector.broadcast %5 : vector<1x128xf32> to vector<8x128xf32>
    %15 = arith.addf %13, %14 : vector<8x128xf32>
    %cst_7 = arith.constant 0.000000e+00 : f32
    %16 = vector.broadcast %cst_7 : f32 to vector<8x128xf32>
    %17 = arith.maximumf %15, %16 : vector<8x128xf32>
    %18 = vector.broadcast %6 : vector<1x128xf32> to vector<8x128xf32>
    %19 = arith.mulf %17, %18 : vector<8x128xf32>
    %cst_8 = arith.constant dense<0.000000e+00> : vector<8xf32>
    %20 = vector.multi_reduction <add>, %19, %cst_8 [1] : vector<8x128xf32> to vector<8xf32>
    %21 = vector.shape_cast %20 : vector<8xf32> to vector<8x1xf32>
    %22 = vector.broadcast %7 : vector<1x1xf32> to vector<8x1xf32>
    %23 = arith.addf %21, %22 : vector<8x1xf32>
    %c0_9 = arith.constant 0 : index
    %c0_10 = arith.constant 0 : index
    %24 = vector.load %arg3[%c0_9, %c0_10] : memref<8x1xf32, #tpu.memory_space<vmem>>, vector<8x1xf32>
    tpu.vector_store %arg3[%c0_9, %c0_10], %23 {strides = array<i32>} : memref<8x1xf32, #tpu.memory_space<vmem>>, vector<8x1xf32>,
    return
  }
  func.func @transform_0(%arg0: i32) -> (i32, i32) {
    %c0_i32 = arith.constant 0 : i32
    %c0_i32_0 = arith.constant 0 : i32
    return %arg0, %c0_i32 : i32, i32
  }
  func.func @transform_1(%arg0: i32) -> (i32, i32) {
    %c0_i32 = arith.constant 0 : i32
    %c0_i32_0 = arith.constant 0 : i32
    %c0_i32_1 = arith.constant 0 : i32
    return %c0_i32, %c0_i32_0 : i32, i32
  }
  func.func @transform_2(%arg0: i32) -> (i32, i32) {
    %c0_i32 = arith.constant 0 : i32
    %c0_i32_0 = arith.constant 0 : i32
    return %arg0, %c0_i32 : i32, i32
  }
}

</mosaic_0001>

<llo_original>
// kernel: vital_signs_forward.1
$region0: #{vital_signs_forward.1}
  #allocation0 [shape = 'u32[]', space=smem, size = 0x4, offset = 0x4, fixed_abs, tag = 'smem constant byte address 0x4 - core index']
  #allocation1 [shape = 'u32[144,128]{1,0:T(1,128)}', space=vmem, size = 0x12000, scoped, tag = 'internal scratch']
  %s0 = inlined_call_operand.hbm [shape: f32[8,16], index: 0, kind: input, shape index: {}]
  %s1 = inlined_call_operand.hbm [shape: f32[152,128], index: 1, kind: input, shape index: {}]
  %s2 = inlined_call_operand.vmem [shape: f32[8,1], index: 2, kind: output, shape index: {}]
  %s3 = sld [smem:[#allocation0]]
  $region26: #{vital_signs_forward.1} parent=0
    _
  %s5 = ssub.s32 1, %s3
  %s6 = scalar_select 0, %s5, %s3
  $region1: #{vital_signs_forward.1} parent=0
    #allocation2 [shape = 'u8[4096]{0}', space=vmem, size = 0x1000, scoped, tag = 'input window, operand 0, single buffered']
    #allocation3 [shape = 's32[1]{0}', space=sflag, size = 0x4, scoped, tag = 'scoped memory for vital_signs_forward.1']
    #allocation4 [shape = 'u8[77824]{0}', space=vmem, size = 0x13000, scoped, tag = 'input window, operand 1, single buffered']
    #allocation5 [shape = 's32[1]{0}', space=sflag, size = 0x4, scoped, tag = 'scoped memory for vital_signs_forward.1']
    %7 = vsyncpa [#allocation3], 0
    %8 = vsyncpa [#allocation5], 0
    // Predicated region
    $region2: #{vital_signs_forward.1} parent=1 // pred_check
      _
    $region3: #{vital_signs_forward.1} parent=1 // pred_check_branch
      %10 = sbr.rel (0) target = $region5
    $region4: #{vital_signs_forward.1} parent=1 // pred_region
      %s12 = ssub.s32 128, 128
      %13 = vsyncadd [#allocation3], %s12
      %s15 = sshll.u32 [#allocation2], 4
      %s16 = int_to_ptr.vmem [resolvable:$true] %s15
      %18 = dma.hbm_to_vmem [thread:$0]  %s0, 128, %s16, [#allocation3]
    $region5: #{vital_signs_forward.1} parent=1 // pred_fallthru
      _
    // Predicated region
    $region6: #{vital_signs_forward.1} parent=1 // pred_check
      _
    $region7: #{vital_signs_forward.1} parent=1 // pred_check_branch
      %20 = sbr.rel (0) target = $region9
    $region8: #{vital_signs_forward.1} parent=1 // pred_region
      %s22 = ssub.s32 2432, 2432
      %23 = vsyncadd [#allocation5], %s22
      %s24 = sshll.u32 [#allocation4], 4
      %s25 = int_to_ptr.vmem [resolvable:$true] %s24
      %30 = dma.hbm_to_vmem [thread:$0]  %s1, 2432, %s25, [#allocation5], 128, 128, 8
    $region9: #{vital_signs_forward.1} parent=1 // pred_fallthru
      _
    // Predicated region
    $region10: #{vital_signs_forward.1} parent=1 // pred_check
      _
    $region11: #{vital_signs_forward.1} parent=1 // pred_check_branch
      %32 = sbr.rel (0) target = $region13
    $region12: #{vital_signs_forward.1} parent=1 // pred_region
      %33 = dma.done [#allocation3], 128
    $region13: #{vital_signs_forward.1} parent=1 // pred_fallthru
      _
    // Predicated region
    $region14: #{vital_signs_forward.1} parent=1 // pred_check
      _
    $region15: #{vital_signs_forward.1} parent=1 // pred_check_branch
      %35 = sbr.rel (0) target = $region17
    $region16: #{vital_signs_forward.1} parent=1 // pred_region
      %36 = dma.done [#allocation5], 2432
    $region17: #{vital_signs_forward.1} parent=1 // pred_fallthru
      _
    %v37 = vld [vmem:[#allocation2] sm:$0xff]
    %v38 = vld [vmem:[#allocation4] sm:$0xff]
    %v39 = vld [vmem:[#allocation4 + $0x8] sm:$0xff]
    %v40 = vld [vmem:[#allocation4 + $0x10] sm:$0xff]
    %v41 = vld [vmem:[#allocation4 + $0x18] sm:$0xff]
    %v42 = vld [vmem:[#allocation4 + $0x20] sm:$0xff]
    %v43 = vld [vmem:[#allocation4 + $0x28] sm:$0xff]
    %v44 = vld [vmem:[#allocation4 + $0x30] sm:$0xff]
    %v45 = vld [vmem:[#allocation4 + $0x38] sm:$0xff]
    %v46 = vld [vmem:[#allocation4 + $0x40] sm:$0xff]
    %v47 = vld [vmem:[#allocation4 + $0x48] sm:$0xff]
    %v48 = vld [vmem:[#allocation4 + $0x50] sm:$0xff]
    %v49 = vld [vmem:[#allocation4 + $0x58] sm:$0xff]
    %v50 = vld [vmem:[#allocation4 + $0x60] sm:$0xff]
    %v51 = vld [vmem:[#allocation4 + $0x68] sm:$0xff]
    %v52 = vld [vmem:[#allocation4 + $0x70] sm:$0xff]
    %v53 = vld [vmem:[#allocation4 + $0x78] sm:$0xff]
    %v54 = vld [vmem:[#allocation4 + $0x80] sm:$0xff]
    %v55 = vld [vmem:[#allocation4 + $0x88] sm:$0xff]
    %v56 = vld [vmem:[#allocation4 + $0x90] sm:$0xff]
    %v57 = vlaneseq
    %v58 = vshrl.u32 %v57, 7
    %v59 = vsub.s32 0, %v58
    %v60 = vrot.slane %v56, %v59
    %vm61 = vcmask 130048
    %v63 = vsel %vm61, %v37, 0
    %65 = vmatprep.subr.mxu0 0.0
    %66 = vmatpush1.msra.mxu0 %v38
    %67 = vmatprep.subr.mxu0 0.0
    %68 = vmatpush1.msra.mxu0 %v39
    %69 = vmatprep.subr.mxu0 0.0
    %70 = vmatpush1.msra.mxu0 0.0
    %71 = vmatprep.subr.mxu0 0.0
    %72 = vmatpush1.msra.mxu0 0.0
    %73 = vmatprep.subr.mxu0 0.0
    %74 = vmatpush1.msra.mxu0 0.0
    %75 = vmatprep.subr.mxu0 0.0
    %76 = vmatpush1.msra.mxu0 0.0
    %77 = vmatprep.subr.mxu0 0.0
    %78 = vmatpush1.msra.mxu0 0.0
    %79 = vmatprep.subr.mxu0 0.0
    %80 = vmatpush1.msra.mxu0 0.0
    %81 = vmatprep.subr.mxu0 0.0
    %82 = vmatpush1.msra.mxu0 0.0
    %83 = vmatprep.subr.mxu0 0.0
    %84 = vmatpush1.msra.mxu0 0.0
    %85 = vmatprep.subr.mxu0 0.0
    %86 = vmatpush1.msra.mxu0 0.0
    %87 = vmatprep.subr.mxu0 0.0
    %88 = vmatpush1.msra.mxu0 0.0
    %89 = vmatprep.subr.mxu0 0.0
    %90 = vmatpush1.msra.mxu0 0.0
    %91 = vmatprep.subr.mxu0 0.0
    %92 = vmatpush1.msra.mxu0 0.0
    %93 = vmatprep.subr.mxu0 0.0
    %94 = vmatpush1.msra.mxu0 0.0
    %95 = vmatprep.subr.mxu0 0.0
    %96 = vmatpush1.msra.mxu0 0.0
    %97 = vmatprep.subr.mxu0 0.0
    %98 = vmatpush1.msra.mxu0 0.0
    %99 = vmatprep.subr.mxu0 0.0
    %100 = vmatpush1.msra.mxu0 0.0
    %101 = vmatprep.subr.mxu0 0.0
    %102 = vmatpush1.msra.mxu0 0.0
    %103 = vmatprep.subr.mxu0 0.0
    %104 = vmatpush1.msra.mxu0 0.0
    %105 = vmatprep.subr.mxu0 0.0
    %106 = vmatpush1.msra.mxu0 0.0
    %107 = vmatprep.subr.mxu0 0.0
    %108 = vmatpush1.msra.mxu0 0.0
    %109 = vmatprep.subr.mxu0 0.0
    %110 = vmatpush1.msra.mxu0 0.0
    %111 = vmatprep.subr.mxu0 0.0
    %112 = vmatpush1.msra.mxu0 0.0
    %113 = vmatprep.subr.mxu0 0.0
    %114 = vmatpush1.msra.mxu0 0.0
    %115 = vmatprep.subr.mxu0 0.0
    %116 = vmatpush1.msra.mxu0 0.0
    %117 = vmatprep.subr.mxu0 0.0
    %118 = vmatpush1.msra.mxu0 0.0
    %119 = vmatprep.subr.mxu0 0.0
    %120 = vmatpush1.msra.mxu0 0.0
    %121 = vmatprep.subr.mxu0 0.0
    %122 = vmatpush1.msra.mxu0 0.0
    %123 = vmatprep.subr.mxu0 0.0
    %124 = vmatpush1.msra.mxu0 0.0
    %125 = vmatprep.subr.mxu0 0.0
    %126 = vmatpush1.msra.mxu0 0.0
    %127 = vmatprep.subr.mxu0 0.0
    %128 = vmatpush1.msra.mxu0 0.0
    %129 = vmatprep.mubr.f32.mxu0 0.0
    %130 = vmatmul.mubr.f32.gmra.mrb[0].mxu0 %v63
    %v131 = vpop.f32.mrb[0].mxu0
    %v132 = vadd.f32 %v60, %v131
    %v133 = vpop.f32.mrb[0].mxu0
    %134 = vdwg.mxu0
    %v135 = vmax.f32 %v132, 0.0
    %v136 = vlaneseq
    %v137 = vshrl.u32 %v136, 7
    %v138 = vsub.s32 1, %v137
    %v139 = vrot.slane %v56, %v138
    %140 = vmatprep.subr.mxu0 0.0
    %141 = vmatpush1.msra.mxu0 %v40
    %142 = vmatprep.subr.mxu0 0.0
    %143 = vmatpush1.msra.mxu0 %v41
    %144 = vmatprep.subr.mxu0 0.0
    %145 = vmatpush1.msra.mxu0 %v42
    %146 = vmatprep.subr.mxu0 0.0
    %147 = vmatpush1.msra.mxu0 %v43
    %148 = vmatprep.subr.mxu0 0.0
    %149 = vmatpush1.msra.mxu0 %v44
    %150 = vmatprep.subr.mxu0 0.0
    %151 = vmatpush1.msra.mxu0 %v45
    %152 = vmatprep.subr.mxu0 0.0
    %153 = vmatpush1.msra.mxu0 %v46
    %154 = vmatprep.subr.mxu0 0.0
    %155 = vmatpush1.msra.mxu0 %v47
    %156 = vmatprep.subr.mxu0 0.0
    %157 = vmatpush1.msra.mxu0 %v48
    %158 = vmatprep.subr.mxu0 0.0
    %159 = vmatpush1.msra.mxu0 %v49
    %160 = vmatprep.subr.mxu0 0.0
    %161 = vmatpush1.msra.mxu0 %v50
    %162 = vmatprep.subr.mxu0 0.0
    %163 = vmatpush1.msra.mxu0 %v51
    %164 = vmatprep.subr.mxu0 0.0
    %165 = vmatpush1.msra.mxu0 %v52
    %166 = vmatprep.subr.mxu0 0.0
    %167 = vmatpush1.msra.mxu0 %v53
    %168 = vmatprep.subr.mxu0 0.0
    %169 = vmatpush1.msra.mxu0 %v54
    %170 = vmatprep.subr.mxu0 0.0
    %171 = vmatpush1.msra.mxu0 %v55
    %172 = vmatprep.subr.mxu0 0.0
    %173 = vmatpush1.msra.mxu0 0.0
    %174 = vmatprep.subr.mxu0 0.0
    %175 = vmatpush1.msra.mxu0 0.0
    %176 = vmatprep.subr.mxu0 0.0
    %177 = vmatpush1.msra.mxu0 0.0
    %178 = vmatprep.subr.mxu0 0.0
    %179 = vmatpush1.msra.mxu0 0.0
    %180 = vmatprep.subr.mxu0 0.0
    %181 = vmatpush1.msra.mxu0 0.0
    %182 = vmatprep.subr.mxu0 0.0
    %183 = vmatpush1.msra.mxu0 0.0
    %184 = vmatprep.subr.mxu0 0.0
    %185 = vmatpush1.msra.mxu0 0.0
    %186 = vmatprep.subr.mxu0 0.0
    %187 = vmatpush1.msra.mxu0 0.0
    %188 = vmatprep.subr.mxu0 0.0
    %189 = vmatpush1.msra.mxu0 0.0
    %190 = vmatprep.subr.mxu0 0.0
    %191 = vmatpush1.msra.mxu0 0.0
    %192 = vmatprep.subr.mxu0 0.0
    %193 = vmatpush1.msra.mxu0 0.0
    %194 = vmatprep.subr.mxu0 0.0
    %195 = vmatpush1.msra.mxu0 0.0
    %196 = vmatprep.subr.mxu0 0.0
    %197 = vmatpush1.msra.mxu0 0.0
    %198 = vmatprep.subr.mxu0 0.0
    %199 = vmatpush1.msra.mxu0 0.0
    %200 = vmatprep.subr.mxu0 0.0
    %201 = vmatpush1.msra.mxu0 0.0
    %202 = vmatprep.subr.mxu0 0.0
    %203 = vmatpush1.msra.mxu0 0.0
    %204 = vmatprep.mubr.f32.mxu0 0.0
    %205 = vmatmul.mubr.f32.gmra.mrb[0].mxu0 %v135
    %v206 = vpop.f32.mrb[0].mxu0
    %v207 = vadd.f32 %v139, %v206
    %v208 = vpop.f32.mrb[0].mxu0
    %209 = vdwg.mxu0
    %v210 = vmax.f32 %v207, 0.0
    %v211 = vlaneseq
    %v212 = vshrl.u32 %v211, 7
    %v213 = vsub.s32 2, %v212
    %v214 = vrot.slane %v56, %v213
    %v215 = vmul.f32 %v210, %v214
    %216 = vadd.xlane.f32.xlu0 %v215
    %v217 = vpop.xlane.xlu0 %216
    %v218 = vlaneseq
    %v219 = vshrl.u32 %v218, 7
    %v220 = vsub.s32 3, %v219
    %v221 = vrot.slane %v56, %v220
    %v222 = vadd.f32 %v217, %v221
    %vm223 = vcmask 7168
    %224 = vst.msk [vmem:[%s2] sm:$0xff] %vm223, %v222
    // Predicated region
    $region18: #{vital_signs_forward.1} parent=1 // pred_check
      _
    $region19: #{vital_signs_forward.1} parent=1 // pred_check_branch
      %226 = sbr.rel (0) target = $region21
    $region20: #{vital_signs_forward.1} parent=1 // pred_region
      _
    $region21: #{vital_signs_forward.1} parent=1 // pred_fallthru
      _
    // Predicated region
    $region22: #{vital_signs_forward.1} parent=1 // pred_check
      _
    $region23: #{vital_signs_forward.1} parent=1 // pred_check_branch
      %228 = sbr.rel (0) target = $region25
    $region24: #{vital_signs_forward.1} parent=1 // pred_region
      _
    $region25: #{vital_signs_forward.1} parent=1 // pred_fallthru
      _
    %229 = vsyncpa [#allocation3], 1
    %230 = vsyncpa [#allocation5], 1

</llo_original>
